<compile_context>
chip_gen: v5e
topology: v5e:2x2
jax: 0.10.0
libtpu: 0.0.40
codegen_flags: <defaults>
</compile_context>

<pallas_src>
from functools import partial

import numpy as np
import jax
import jax.numpy as jnp
from jax.experimental import pallas as pl
from jax.experimental.pallas import tpu as pltpu


# --------------------------------------------------------------------------
# p4m group machinery (host-side glue, runs once at parameter-setup time)
# --------------------------------------------------------------------------
# Group element index s = m*4 + j  <->  g = F^m R^j (R = 90deg rot, F = flip).

def p4m_mul(a, b):
    ma, ja = a // 4, a % 4
    mb, jb = b // 4, b % 4
    if mb == 0:
        return ma * 4 + (ja + jb) % 4
    return (ma ^ 1) * 4 + (jb - ja) % 4


def p4m_inv(a):
    m, j = a // 4, a % 4
    if m == 0:
        return (-j) % 4
    return a


def _spatial_transform(w, s):
    m, j = s // 4, s % 4
    out = np.rot90(w, k=j, axes=(-2, -1))
    if m:
        out = out[..., ::-1]
    return out


def p4m_expand_filter(w):
    """(Cout, Cin, 8, k, k) -> (Cout*8, Cin*8, k, k) expanded p4m filter."""
    w = np.asarray(w, dtype=np.float32)
    cout, cin, g, k, _ = w.shape
    assert g == 8
    out = np.zeros((cout, 8, cin, 8, k, k), dtype=np.float32)
    for s in range(8):
        s_inv = p4m_inv(s)
        for t in range(8):
            src = p4m_mul(s_inv, t)
            out[:, s, :, t] = _spatial_transform(w[:, :, src], s)
    return out.reshape(cout * 8, cin * 8, k, k)


# --------------------------------------------------------------------------
# small helpers
# --------------------------------------------------------------------------
def _ceil_to(a, b):
    return -(-a // b) * b


def _pick_tk(k):
    for t in (512, 384, 256, 128):
        if k % t == 0:
            return t
    return 128 if k < 128 else 256


def _pick_tn(n):
    for t in (512, 256, 128):
        if n % t == 0:
            return t
    return 128 if n < 128 else 256


def _pick_div(v, cands):
    for t in cands:
        if v % t == 0:
            return t
    return v


def _pad_vec(v, n):
    v = v.astype(jnp.float32)
    return jnp.pad(v, (0, n - v.shape[0]))


_VMEM_LIMIT = 48 * 1024 * 1024   # explicit scoped-VMEM budget (fits v5e/v6e/v7x)


# --------------------------------------------------------------------------
# Pallas kernel 1: tiled matmul + per-column BatchNorm statistics
#   grid = (nm, nn, nk); acc scratch (TM, TN) f32; output / stats blocks are
#   indexed by (m, n) and stay resident across the k (reduction) axis.
# --------------------------------------------------------------------------
def _emit_y_and_stats(y_ref, st_ref, acc_ref):
    y = acc_ref[...]
    y_ref[...] = y.astype(y_ref.dtype)
    s = jnp.sum(y, axis=0, keepdims=True)
    ss = jnp.sum(y * y, axis=0, keepdims=True)
    st_ref[...] = jnp.concatenate([s, ss], axis=0)[None]


def _mm_stats_kernel(x_ref, w_ref, y_ref, st_ref, acc_ref, *, nk):
    k_idx = pl.program_id(2)      # hoisted: never call program_id inside pl.when

    @pl.when(k_idx == 0)
    def _init():
        acc_ref[...] = jnp.zeros_like(acc_ref)

    acc_ref[...] += jnp.dot(x_ref[...], w_ref[...],
                            preferred_element_type=jnp.float32)

    @pl.when(k_idx == nk - 1)
    def _finalize():
        _emit_y_and_stats(y_ref, st_ref, acc_ref)


def _mm_affine_relu_stats_kernel(x_ref, sc_ref, bi_ref, w_ref, y_ref, st_ref,
                                 acc_ref, xn_ref, *, nk, tm, m_real):
    m_idx = pl.program_id(0)
    n_idx = pl.program_id(1)
    k_idx = pl.program_id(2)
    row0 = m_idx * tm

    @pl.when(k_idx == 0)
    def _init():
        acc_ref[...] = jnp.zeros_like(acc_ref)

    # Producer BatchNorm affine + ReLU fused into the input path.  It is
    # computed once per (m, k) tile (at n == 0) and cached in VMEM so the VPU
    # work is not repeated for every output-N tile.  Padding rows are zeroed
    # here so the BN statistics in the epilogue need no extra masking.
    @pl.when(n_idx == 0)
    def _normalize():
        xa = x_ref[...].astype(jnp.float32) * sc_ref[...] + bi_ref[...]
        xa = jnp.maximum(xa, 0.0)
        rows = jax.lax.broadcasted_iota(jnp.int32, (tm, 1), 0) + row0
        xa = jnp.where(rows < m_real, xa, 0.0)
        xn_ref[k_idx] = xa.astype(jnp.bfloat16)

    acc_ref[...] += jnp.dot(xn_ref[k_idx], w_ref[...],
                            preferred_element_type=jnp.float32)

    @pl.when(k_idx == nk - 1)
    def _finalize():
        _emit_y_and_stats(y_ref, st_ref, acc_ref)


def matmul_stats(x, wm, *, in_scale=None, in_bias=None, m_real=None):
    """y = (optionally relu(x*scale+bias)) @ w, plus per-column sum / sumsq.

    x : (M, K) activation (any float dtype; cast to bf16).
    wm: prepared weight dict {'w': (Kp, Np) bf16, 'Kp', 'Np', 'TK', 'TN'}.
    Returns y (Mp, Np) bf16, col_sum (Np,), col_sumsq (Np,), (Mp, Np).
    """
    M, K = x.shape
    if m_real is None:
        m_real = M
    Kp, Np, TK, TN = wm['Kp'], wm['Np'], wm['TK'], wm['TN']
    TM = 512 if M >= 512 else (256 if M >= 256 else _ceil_to(M, 16))
    Mp = _ceil_to(M, TM)
    nm, nn, nk = Mp // TM, Np // TN, Kp // TK

    xp = x.astype(jnp.bfloat16)
    if (Mp, Kp) != (M, K):
        xp = jnp.pad(xp, ((0, Mp - M), (0, Kp - K)))

    x_spec = pl.BlockSpec((TM, TK), lambda m, n, k: (m, k))
    w_spec = pl.BlockSpec((TK, TN), lambda m, n, k: (k, n))
    y_spec = pl.BlockSpec((TM, TN), lambda m, n, k: (m, n))
    st_spec = pl.BlockSpec((1, 2, TN), lambda m, n, k: (m, 0, n))
    vec_spec = pl.BlockSpec((1, TK), lambda m, n, k: (0, k))

    scratch = [pltpu.VMEM((TM, TN), jnp.float32)]
    if in_scale is None:
        kernel = partial(_mm_stats_kernel, nk=nk)
        args = (xp, wm['w'])
        in_specs = [x_spec, w_spec]
        # m, n independent -> both parallel (megacore); k is the reduction.
        dims = ("parallel", "parallel", "arbitrary")
    else:
        sc = jnp.pad(in_scale.astype(jnp.float32), (0, Kp - in_scale.shape[0]))
        bi = jnp.pad(in_bias.astype(jnp.float32), (0, Kp - in_bias.shape[0]))
        kernel = partial(_mm_affine_relu_stats_kernel, nk=nk, tm=TM,
                         m_real=m_real)
        args = (xp, sc[None, :], bi[None, :], wm['w'])
        in_specs = [x_spec, vec_spec, vec_spec, w_spec]
        scratch.append(pltpu.VMEM((nk, TM, TK), jnp.bfloat16))
        # the per-m VMEM cache is filled at n == 0, so the n axis must stay on
        # one core -> only m is marked parallel here.
        dims = ("parallel", "arbitrary", "arbitrary")

    y, stats = pl.pallas_call(
        kernel,
        out_shape=(jax.ShapeDtypeStruct((Mp, Np), jnp.bfloat16),
                   jax.ShapeDtypeStruct((nm, 2, Np), jnp.float32)),
        grid_spec=pltpu.PrefetchScalarGridSpec(
            num_scalar_prefetch=0,
            grid=(nm, nn, nk),
            in_specs=in_specs,
            out_specs=[y_spec, st_spec],
            scratch_shapes=scratch),
        compiler_params=pltpu.CompilerParams(
            dimension_semantics=dims,
            vmem_limit_bytes=_VMEM_LIMIT),
    )(*args)

    col_sum = jnp.sum(stats[:, 0, :], axis=0)
    col_sumsq = jnp.sum(stats[:, 1, :], axis=0)
    return y, col_sum, col_sumsq, (Mp, Np)


# --------------------------------------------------------------------------
# Pallas kernel 2: tiled element-wise affine normalize (+ residual) (+ ReLU)
# --------------------------------------------------------------------------
def _affine_kernel(x_ref, sc_ref, bi_ref, o_ref, *, relu):
    y = x_ref[...].astype(jnp.float32) * sc_ref[...] + bi_ref[...]
    if relu:
        y = jnp.maximum(y, 0.0)
    o_ref[...] = y.astype(o_ref.dtype)


def _affine_add_kernel(x_ref, sc_ref, bi_ref, r_ref, rsc_ref, rbi_ref, o_ref,
                       *, relu):
    y = x_ref[...].astype(jnp.float32) * sc_ref[...] + bi_ref[...]
    y = y + r_ref[...].astype(jnp.float32) * rsc_ref[...] + rbi_ref[...]
    if relu:
        y = jnp.maximum(y, 0.0)
    o_ref[...] = y.astype(o_ref.dtype)


def affine_pallas(x, scale, bias, *, relu, residual=None, res_scale=None,
                  res_bias=None, out_dtype=jnp.float32):
    """out = maybe_relu(x*scale + bias [+ residual*res_scale + res_bias])."""
    Mp, Np = x.shape
    TN = _pick_div(Np, (512, 256, 128))
    TM = _pick_div(Mp, (512, 256, 128, 64, 32, 16))
    nm, nn = Mp // TM, Np // TN

    row_spec = pl.BlockSpec((TM, TN), lambda nb, mb: (mb, nb))
    vec_spec = pl.BlockSpec((1, TN), lambda nb, mb: (0, nb))

    sc = scale.astype(jnp.float32).reshape(1, Np)
    bi = bias.astype(jnp.float32).reshape(1, Np)

    if residual is None:
        kernel = partial(_affine_kernel, relu=relu)
        args = (x, sc, bi)
        in_specs = [row_spec, vec_spec, vec_spec]
    else:
        kernel = partial(_affine_add_kernel, relu=relu)
        args = (x, sc, bi, residual,
                res_scale.astype(jnp.float32).reshape(1, Np),
                res_bias.astype(jnp.float32).reshape(1, Np))
        in_specs = [row_spec, vec_spec, vec_spec, row_spec, vec_spec, vec_spec]

    return pl.pallas_call(
        kernel,
        out_shape=jax.ShapeDtypeStruct((Mp, Np), out_dtype),
        grid_spec=pltpu.PrefetchScalarGridSpec(
            num_scalar_prefetch=0,
            grid=(nn, nm),      # n outer -> scale/bias blocks stay resident
            in_specs=in_specs,
            out_specs=row_spec),
        compiler_params=pltpu.CompilerParams(
            dimension_semantics=("parallel", "parallel"),
            vmem_limit_bytes=_VMEM_LIMIT),
    )(*args)


# --------------------------------------------------------------------------
# BN statistics -> per-column affine (tiny, plain JAX)
# --------------------------------------------------------------------------
def bn_affine(col_sum, col_sumsq, gamma, beta, count, eps=1e-5):
    cout = gamma.shape[0]
    s = col_sum[:cout * 8].reshape(cout, 8).sum(axis=1)
    ss = col_sumsq[:cout * 8].reshape(cout, 8).sum(axis=1)
    mean = s / count
    # TODO(synk): E[x^2]-E[x]^2 in f32 can cancel for huge activations; a
    # two-pass / Welford stats kernel would be more robust.
    var = jnp.maximum(ss / count - mean * mean, 0.0)
    scale_c = gamma.astype(jnp.float32) * jax.lax.rsqrt(var + eps)
    bias_c = beta.astype(jnp.float32) - mean * scale_c
    return jnp.repeat(scale_c, 8), jnp.repeat(bias_c, 8)


# --------------------------------------------------------------------------
# im2col glue for the 3x3 / stride conv (pad=1) -- bf16, host-side JAX
# --------------------------------------------------------------------------
def im2col_3x3(x_nhwc, stride):
    n, h, w, c = x_nhwc.shape
    ho = (h + 2 - 3) // stride + 1
    wo = (w + 2 - 3) // stride + 1
    xp = jnp.pad(x_nhwc, ((0, 0), (1, 1), (1, 1), (0, 0)))
    cols = [xp[:, kh:kh + (ho - 1) * stride + 1:stride,
               kw:kw + (wo - 1) * stride + 1:stride, :]
            for kh in range(3) for kw in range(3)]
    patches = jnp.concatenate(cols, axis=-1)          # (N, Ho, Wo, 9*C)
    return patches.reshape(n * ho * wo, 9 * c), ho, wo


# --------------------------------------------------------------------------
# Bottleneck parameters + one-time weight preparation
# --------------------------------------------------------------------------
EXPANSION = 4


def _prep_weight(wmat):
    """Pad/transpose nothing at forward time: (K, N) f32 -> padded bf16."""
    K, N = wmat.shape
    TK, TN = _pick_tk(K), _pick_tn(N)
    Kp, Np = _ceil_to(K, TK), _ceil_to(N, TN)
    w = jnp.pad(wmat.astype(jnp.bfloat16), ((0, Kp - K), (0, Np - N)))
    return {'w': w, 'K': K, 'N': N, 'Kp': Kp, 'Np': Np, 'TK': TK, 'TN': TN}


def prepare_matmul_weights(p, in_planes, planes):
    """Pre-transpose / pre-pad / pre-cast the expanded p4m filters to bf16
    matmul operands once at init time."""
    c18 = planes * 8
    mm = {'w1': _prep_weight(jnp.transpose(p['w1e'][:, :, 0, 0]))}
    np1 = mm['w1']['Np']

    # conv2: im2col column order is (kh, kw, padded-in-channel)
    c28 = p['w2e'].shape[0]
    w2t = jnp.transpose(p['w2e'], (2, 3, 1, 0))            # (3, 3, c18, c28)
    w2full = jnp.zeros((3, 3, np1, c28), jnp.float32).at[:, :, :c18, :].set(w2t)
    mm['w2'] = _prep_weight(w2full.reshape(9 * np1, c28))
    np2 = mm['w2']['Np']

    # conv3: its input is y2 at padded width np2 -> zero-pad the K rows
    w3m = jnp.transpose(p['w3e'][:, :, 0, 0])               # (c18, c38)
    c38 = w3m.shape[1]
    w3full = jnp.zeros((np2, c38), jnp.float32).at[:c18, :].set(w3m)
    mm['w3'] = _prep_weight(w3full)

    if 'wse' in p:
        mm['ws'] = _prep_weight(jnp.transpose(p['wse'][:, :, 0, 0]))
    return mm


def init_bottleneck_params(key, in_planes, planes, stride):
    ks = jax.random.split(key, 4)

    def conv_w(k, cout, cin, ksz):
        fan_in = cin * 8 * ksz * ksz
        std = float(np.sqrt(2.0 / fan_in))
        return np.asarray(jax.random.normal(k, (cout, cin, 8, ksz, ksz),
                                            jnp.float32)) * std

    p = {
        'w1e': jnp.asarray(p4m_expand_filter(conv_w(ks[0], planes, in_planes, 1))),
        'w2e': jnp.asarray(p4m_expand_filter(conv_w(ks[1], planes, planes, 3))),
        'w3e': jnp.asarray(p4m_expand_filter(conv_w(ks[2], EXPANSION * planes, planes, 1))),
        'g1': jnp.ones((planes,), jnp.float32), 'b1': jnp.zeros((planes,), jnp.float32),
        'g2': jnp.ones((planes,), jnp.float32), 'b2': jnp.zeros((planes,), jnp.float32),
        'g3': jnp.ones((EXPANSION * planes,), jnp.float32),
        'b3': jnp.zeros((EXPANSION * planes,), jnp.float32),
    }
    if stride != 1 or in_planes != EXPANSION * planes:
        p['wse'] = jnp.asarray(p4m_expand_filter(conv_w(ks[3], EXPANSION * planes, in_planes, 1)))
        p['gs'] = jnp.ones((EXPANSION * planes,), jnp.float32)
        p['bs'] = jnp.zeros((EXPANSION * planes,), jnp.float32)
    p['mm'] = prepare_matmul_weights(p, in_planes, planes)
    return p


# --------------------------------------------------------------------------
# Bottleneck forward
# --------------------------------------------------------------------------
def bottleneck_forward_pallas(x, p, stride):
    """x: (N, Cin, 8, H, W) f32 -> (N, 4*planes, 8, Ho, Wo) f32."""
    mm = p['mm']
    n, cin, g, h, w = x.shape
    cin8 = cin * g
    x_nhwc = jnp.transpose(x.reshape(n, cin8, h, w), (0, 2, 3, 1))
    M1 = n * h * w
    x_rows = x_nhwc.reshape(M1, cin8)

    # ---- conv1 (1x1 gconv as matmul) + BN1 batch statistics ----
    y1, s1, ss1, (Mp1, Np1) = matmul_stats(x_rows, mm['w1'])
    sc1, bi1 = bn_affine(s1, ss1, p['g1'], p['b1'], float(M1 * 8))

    # ---- BN1 affine + ReLU (tiled element-wise), keep padded channel width --
    y1n = affine_pallas(y1, _pad_vec(sc1, Np1), _pad_vec(bi1, Np1),
                        relu=True, out_dtype=jnp.bfloat16)
    y1n = y1n[:M1].reshape(n, h, w, Np1)
    # TODO(synk): the 3x3 conv still goes through an XLA-side im2col (9x
    # activation expansion in HBM); a fused halo-block spatial conv2 kernel
    # would remove this remaining activation read/write amplification.
    x2, ho, wo = im2col_3x3(y1n, stride)
    M2 = n * ho * wo

    # ---- conv2 (3x3, stride, pad=1) : tiled matmul + BN2 statistics ----
    y2, s2, ss2, (Mp2, Np2) = matmul_stats(x2, mm['w2'])
    sc2, bi2 = bn_affine(s2, ss2, p['g2'], p['b2'], float(M2 * 8))

    # ---- conv3 (1x1) with BN2 + ReLU fused into its input path ----
    y3, s3, ss3, (Mp3, Np3) = matmul_stats(
        y2, mm['w3'], in_scale=sc2, in_bias=bi2, m_real=M2)
    sc3, bi3 = bn_affine(s3, ss3, p['g3'], p['b3'], float(M2 * 8))
    N3 = p['g3'].shape[0] * 8

    # ---- shortcut ----
    if 'wse' in p:
        xs = x_nhwc[:, ::stride, ::stride, :].reshape(M2, cin8)
        ys, sS, ssS, _ = matmul_stats(xs, mm['ws'])
        scS, biS = bn_affine(sS, ssS, p['gs'], p['bs'], float(M2 * 8))
        assert ys.shape == y3.shape
        res, res_sc, res_bi = ys, _pad_vec(scS, Np3), _pad_vec(biS, Np3)
    else:
        # identity shortcut (stride == 1, channels already match); bf16 read
        # halves the residual HBM traffic of the mem-bound epilogue pass.
        res = jnp.pad(x_rows.astype(jnp.bfloat16),
                      ((0, Mp3 - M1), (0, Np3 - cin8)))
        res_sc = jnp.ones((Np3,), jnp.float32)
        res_bi = jnp.zeros((Np3,), jnp.float32)

    # ---- BN3 + shortcut add + ReLU, fused in one element-wise kernel ----
    out_rows = affine_pallas(y3, _pad_vec(sc3, Np3), _pad_vec(bi3, Np3),
                             relu=True, residual=res, res_scale=res_sc,
                             res_bias=res_bi, out_dtype=jnp.float32)

    out = out_rows[:M2, :N3].reshape(n, ho, wo, N3)
    return jnp.transpose(out, (0, 3, 1, 2)).reshape(n, N3 // 8, 8, ho, wo)


# --------------------------------------------------------------------------
# Pure-JAX reference (PyTorch semantics: gconv via expanded-filter conv2d,
# BatchNorm3d in training mode with batch statistics)
# --------------------------------------------------------------------------
def reference_forward(x, p, stride):
    def gconv2d(x5, w_exp, strd, pad):
        n, c, g, h, w = x5.shape
        x4 = x5.reshape(n, c * g, h, w)
        out = jax.lax.conv_general_dilated(
            x4, w_exp, window_strides=(strd, strd),
            padding=((pad, pad), (pad, pad)),
            dimension_numbers=("NCHW", "OIHW", "NCHW"))
        cout8 = w_exp.shape[0]
        return out.reshape(n, cout8 // 8, 8, out.shape[2], out.shape[3])

    def bn3d(y, gamma, beta, eps=1e-5):
        mean = jnp.mean(y, axis=(0, 2, 3, 4), keepdims=True)
        var = jnp.mean((y - mean) ** 2, axis=(0, 2, 3, 4), keepdims=True)
        ga = gamma.reshape(1, -1, 1, 1, 1)
        be = beta.reshape(1, -1, 1, 1, 1)
        return (y - mean) / jnp.sqrt(var + eps) * ga + be

    out = jax.nn.relu(bn3d(gconv2d(x, p['w1e'], 1, 0), p['g1'], p['b1']))
    out = jax.nn.relu(bn3d(gconv2d(out, p['w2e'], stride, 1), p['g2'], p['b2']))
    out = bn3d(gconv2d(out, p['w3e'], 1, 0), p['g3'], p['b3'])
    if 'wse' in p:
        sc = bn3d(gconv2d(x, p['wse'], stride, 0), p['gs'], p['bs'])
    else:
        sc = x
    return jax.nn.relu(out + sc)


# --------------------------------------------------------------------------
if __name__ == "__main__":
    key = jax.random.PRNGKey(0)
    kx, kp = jax.random.split(key)

    N, in_planes, planes, stride, H, W = 2, 4, 2, 2, 8, 8
    x = jax.random.normal(kx, (N, in_planes, 8, H, W), jnp.float32)
    params = init_bottleneck_params(kp, in_planes, planes, stride)

    out = jax.block_until_ready(bottleneck_forward_pallas(x, params, stride))
    ref = jax.block_until_ready(reference_forward(x, params, stride))

    assert out.shape == (N, EXPANSION * planes, 8, H // stride, W // stride)
    # bf16 MXU path vs f32 XLA reference through 3 conv+BN stages.
    np.testing.assert_allclose(np.asarray(out), np.asarray(ref),
                               atol=1e-1, rtol=1e-1)
    print("KERNEL_OK")
</pallas_src>

<mosaic_0001>
module attributes {stable_mosaic.version = 11 : i64} {
  func.func @_mm_stats_kernel(%arg0: i32, %arg1: i32, %arg2: i32, %arg3: memref<128x128xbf16, #tpu.memory_space<vmem>>, %arg4: memref<128x128xbf16, #tpu.memory_space<vmem>>, %arg5: memref<128x128xbf16, #tpu.memory_space<vmem>>, %arg6: memref<1x2x128xf32, #tpu.memory_space<vmem>>, %arg7: memref<128x128xf32, #tpu.memory_space<vmem>>) attributes {dimension_semantics = [#tpu.dimension_semantics<parallel>, #tpu.dimension_semantics<parallel>, #tpu.dimension_semantics<arbitrary>], iteration_bounds = array<i64: 1, 1, 1>, scalar_prefetch = 0 : i64, scratch_operands = 1 : i64, tpu.core_type = #tpu.core_type<tc>, window_params = [{transform_indices = @transform_0, window_bounds = array<i64: 128, 128>}, {transform_indices = @transform_1, window_bounds = array<i64: 128, 128>}, {transform_indices = @transform_2, window_bounds = array<i64: 128, 128>}, {transform_indices = @transform_3, window_bounds = array<i64: 1, 2, 128>}]} {
    %c0_i32 = arith.constant 0 : i32
    %0 = arith.cmpi eq, %arg2, %c0_i32 : i32
    %1 = arith.extui %0 : i1 to i32
    %c0_i32_0 = arith.constant 0 : i32
    %2 = arith.cmpi ne, %1, %c0_i32_0 : i32
    scf.if %2 {
      %cst_10 = arith.constant 0.000000e+00 : f32
      %12 = vector.broadcast %cst_10 : f32 to vector<128x128xf32>
      %c0_11 = arith.constant 0 : index
      %c0_12 = arith.constant 0 : index
      %13 = vector.load %arg7[%c0_11, %c0_12] : memref<128x128xf32, #tpu.memory_space<vmem>>, vector<128x128xf32>
      tpu.vector_store %arg7[%c0_11, %c0_12], %12 {strides = array<i32>} : memref<128x128xf32, #tpu.memory_space<vmem>>, vector<128x128xf32>,
    } else {
    }
    %c0 = arith.constant 0 : index
    %c0_1 = arith.constant 0 : index
    %3 = vector.load %arg7[%c0, %c0_1] : memref<128x128xf32, #tpu.memory_space<vmem>>, vector<128x128xf32>
    %c0_2 = arith.constant 0 : index
    %c0_3 = arith.constant 0 : index
    %4 = vector.load %arg3[%c0_2, %c0_3] : memref<128x128xbf16, #tpu.memory_space<vmem>>, vector<128x128xbf16>
    %c0_4 = arith.constant 0 : index
    %c0_5 = arith.constant 0 : index
    %5 = vector.load %arg4[%c0_4, %c0_5] : memref<128x128xbf16, #tpu.memory_space<vmem>>, vector<128x128xbf16>
    %cst = arith.constant dense<0.000000e+00> : vector<128x128xf32>
    %6 = tpu.matmul %4, %5, %cst {dimension_numbers = #tpu.dot_dimension_numbers<[1], [0], [0], [1], [0, 0, 1, 1], [], []>} : vector<128x128xbf16>, vector<128x128xbf16>, vector<128x128xf32> -> vector<128x128xf32>
    %7 = arith.addf %3, %6 : vector<128x128xf32>
    %c0_6 = arith.constant 0 : index
    %c0_7 = arith.constant 0 : index
    %8 = vector.load %arg7[%c0_6, %c0_7] : memref<128x128xf32, #tpu.memory_space<vmem>>, vector<128x128xf32>
    tpu.vector_store %arg7[%c0_6, %c0_7], %7 {strides = array<i32>} : memref<128x128xf32, #tpu.memory_space<vmem>>, vector<128x128xf32>,
    %c0_i32_8 = arith.constant 0 : i32
    %9 = arith.cmpi eq, %arg2, %c0_i32_8 : i32
    %10 = arith.extui %9 : i1 to i32
    %c0_i32_9 = arith.constant 0 : i32
    %11 = arith.cmpi ne, %10, %c0_i32_9 : i32
    scf.if %11 {
      %c0_10 = arith.constant 0 : index
      %c0_11 = arith.constant 0 : index
      %12 = vector.load %arg7[%c0_10, %c0_11] : memref<128x128xf32, #tpu.memory_space<vmem>>, vector<128x128xf32>
      %13 = arith.truncf %12 : vector<128x128xf32> to vector<128x128xbf16>
      %c0_12 = arith.constant 0 : index
      %c0_13 = arith.constant 0 : index
      %14 = vector.load %arg5[%c0_12, %c0_13] : memref<128x128xbf16, #tpu.memory_space<vmem>>, vector<128x128xbf16>
      tpu.vector_store %arg5[%c0_12, %c0_13], %13 {strides = array<i32>} : memref<128x128xbf16, #tpu.memory_space<vmem>>, vector<128x128xbf16>,
      %cst_14 = arith.constant dense<0.000000e+00> : vector<128xf32>
      %15 = vector.multi_reduction <add>, %12, %cst_14 [0] : vector<128x128xf32> to vector<128xf32>
      %16 = vector.shape_cast %15 : vector<128xf32> to vector<1x128xf32>
      %17 = arith.mulf %12, %12 : vector<128x128xf32>
      %cst_15 = arith.constant dense<0.000000e+00> : vector<128xf32>
      %18 = vector.multi_reduction <add>, %17, %cst_15 [0] : vector<128x128xf32> to vector<128xf32>
      %19 = vector.shape_cast %18 : vector<128xf32> to vector<1x128xf32>
      %20 = tpu.concatenate %16, %19 in 0 : vector<1x128xf32>, vector<1x128xf32> -> vector<2x128xf32>
      %21 = vector.shape_cast %20 : vector<2x128xf32> to vector<1x2x128xf32>
      %c0_16 = arith.constant 0 : index
      %c0_17 = arith.constant 0 : index
      %c0_18 = arith.constant 0 : index
      %22 = vector.load %arg6[%c0_16, %c0_17, %c0_18] : memref<1x2x128xf32, #tpu.memory_space<vmem>>, vector<1x2x128xf32>
      tpu.vector_store %arg6[%c0_16, %c0_17, %c0_18], %21 {strides = array<i32>} : memref<1x2x128xf32, #tpu.memory_space<vmem>>, vector<1x2x128xf32>,
    } else {
    }
    return
  }
  func.func @transform_0(%arg0: i32, %arg1: i32, %arg2: i32) -> (i32, i32) {
    %c0_i32 = arith.constant 0 : i32
    return %arg0, %arg2 : i32, i32
  }
  func.func @transform_1(%arg0: i32, %arg1: i32, %arg2: i32) -> (i32, i32) {
    %c0_i32 = arith.constant 0 : i32
    return %arg2, %arg1 : i32, i32
  }
  func.func @transform_2(%arg0: i32, %arg1: i32, %arg2: i32) -> (i32, i32) {
    %c0_i32 = arith.constant 0 : i32
    return %arg0, %arg1 : i32, i32
  }
  func.func @transform_3(%arg0: i32, %arg1: i32, %arg2: i32) -> (i32, i32, i32) {
    %c0_i32 = arith.constant 0 : i32
    %c0_i32_0 = arith.constant 0 : i32
    return %arg0, %c0_i32, %arg1 : i32, i32, i32
  }
}

</mosaic_0001>

<llo_original>
// kernel: tpu_custom_call.1
$region0: #{tpu_custom_call.1}
  #allocation0 [shape = 'u32[]', space=smem, size = 0x4, offset = 0x4, fixed_abs, tag = 'smem constant byte address 0x4 - core index']
  #allocation1 [shape = 'u32[72,128]{1,0:T(1,128)}', space=vmem, size = 0x9000, scoped, tag = 'internal scratch']
  #allocation2 [shape = 'f32[128,128]{1,0:T(8,128)}', space=vmem, size = 0x10000, scoped, tag = 'scratch operand']
  %s0 = inlined_call_operand.hbm [shape: bf16[128,128], index: 0, kind: input, shape index: {}]
  %s1 = inlined_call_operand.hbm [shape: bf16[128,128], index: 1, kind: input, shape index: {}]
  %s2 = inlined_call_operand.hbm [shape: bf16[128,128], index: 2, kind: output, shape index: {0}]
  %s3 = inlined_call_operand.hbm [shape: f32[1,2,128], index: 3, kind: output, shape index: {1}]
  %4 = xla_tuple %s2, %s3
  %s5 = sld [smem:[#allocation0]]
  $region42: #{tpu_custom_call.1} parent=0
    _
  %s7 = ssub.s32 1, %s5
  %s8 = scalar_select 0, %s7, %s5
  $region1: #{tpu_custom_call.1} parent=0
    #allocation3 [shape = 'u8[32768]{0}', space=vmem, size = 0x8000, scoped, tag = 'input window, operand 0, single buffered']
    #allocation4 [shape = 's32[1]{0}', space=sflag, size = 0x4, scoped, tag = 'scoped memory for tpu_custom_call.1']
    #allocation5 [shape = 's32[1]{0}', space=sflag, size = 0x4, scoped, tag = 'scoped memory for tpu_custom_call.1']
    #allocation6 [shape = 'u8[32768]{0}', space=vmem, size = 0x8000, scoped, tag = 'input window, operand 1, single buffered']
    #allocation7 [shape = 's32[1]{0}', space=sflag, size = 0x4, scoped, tag = 'scoped memory for tpu_custom_call.1']
    #allocation8 [shape = 'u8[32768]{0}', space=vmem, size = 0x8000, scoped, tag = 'output window, operand 0, single buffered']
    #allocation9 [shape = 'u8[1024]{0}', space=vmem, size = 0x400, scoped, tag = 'output window, operand 1, single buffered']
    #allocation10 [shape = 's32[1]{0}', space=sflag, size = 0x4, scoped, tag = 'scoped memory for tpu_custom_call.1']
    %9 = vsyncpa [#allocation4], 0
    %10 = vsyncpa [#allocation7], 0
    %11 = vsyncpa [#allocation5], 0
    %12 = vsyncpa [#allocation10], 0
    // Predicated region
    $region2: #{tpu_custom_call.1} parent=1 // pred_check
      _
    $region3: #{tpu_custom_call.1} parent=1 // pred_check_branch
      %14 = sbr.rel (0) target = $region5
    $region4: #{tpu_custom_call.1} parent=1 // pred_region
      %16 = vsyncadd [#allocation4], 0
      %s17 = sshll.u32 %s0, 4
      %s18 = int_to_ptr.hbm [resolvable:$true] %s17
      %s19 = sshll.u32 [#allocation3], 4
      %s20 = int_to_ptr.vmem [resolvable:$true] %s19
      %25 = dma.hbm_to_vmem [thread:$0]  %s18, 1024, %s20, [#allocation4], 64, 64, 4
    $region5: #{tpu_custom_call.1} parent=1 // pred_fallthru
      _
    // Predicated region
    $region6: #{tpu_custom_call.1} parent=1 // pred_check
      _
    $region7: #{tpu_custom_call.1} parent=1 // pred_check_branch
      %27 = sbr.rel (0) target = $region9
    $region8: #{tpu_custom_call.1} parent=1 // pred_region
      %29 = vsyncadd [#allocation7], 0
      %s30 = sshll.u32 %s1, 4
      %s31 = int_to_ptr.hbm [resolvable:$true] %s30
      %s32 = sshll.u32 [#allocation6], 4
      %s33 = int_to_ptr.vmem [resolvable:$true] %s32
      %38 = dma.hbm_to_vmem [thread:$0]  %s31, 1024, %s33, [#allocation7], 64, 64, 4
    $region9: #{tpu_custom_call.1} parent=1 // pred_fallthru
      _
    // Predicated region
    $region10: #{tpu_custom_call.1} parent=1 // pred_check
      _
    $region11: #{tpu_custom_call.1} parent=1 // pred_check_branch
      %40 = sbr.rel (0) target = $region13
    $region12: #{tpu_custom_call.1} parent=1 // pred_region
      %42 = dma.done [#allocation4], 1024
    $region13: #{tpu_custom_call.1} parent=1 // pred_fallthru
      _
    // Predicated region
    $region14: #{tpu_custom_call.1} parent=1 // pred_check
      _
    $region15: #{tpu_custom_call.1} parent=1 // pred_check_branch
      %44 = sbr.rel (0) target = $region17
    $region16: #{tpu_custom_call.1} parent=1 // pred_region
      %46 = dma.done [#allocation7], 1024
    $region17: #{tpu_custom_call.1} parent=1 // pred_fallthru
      _
    %p47 = scmp.eq.s32.totalorder 0, 0
    // Predicated region
    $region18: #{tpu_custom_call.1} parent=1 // pred_check
      %p48 = pneg %p47
    $region19: #{tpu_custom_call.1} parent=1 // pred_check_branch
      %50 = sbr.rel (%p48) target = $region21
    $region20: #{tpu_custom_call.1} parent=1 // pred_region
      %51 = vst [vmem:[#allocation2] sm:$0xff] 0.0
      %52 = vst [vmem:[#allocation2 + $0x8] sm:$0xff] 0.0
      %53 = vst [vmem:[#allocation2 + $0x10] sm:$0xff] 0.0
      %54 = vst [vmem:[#allocation2 + $0x18] sm:$0xff] 0.0
      %55 = vst [vmem:[#allocation2 + $0x20] sm:$0xff] 0.0
      %56 = vst [vmem:[#allocation2 + $0x28] sm:$0xff] 0.0
      %57 = vst [vmem:[#allocation2 + $0x30] sm:$0xff] 0.0
      %58 = vst [vmem:[#allocation2 + $0x38] sm:$0xff] 0.0
      %59 = vst [vmem:[#allocation2 + $0x40] sm:$0xff] 0.0
      %60 = vst [vmem:[#allocation2 + $0x48] sm:$0xff] 0.0
      %61 = vst [vmem:[#allocation2 + $0x50] sm:$0xff] 0.0
      %62 = vst [vmem:[#allocation2 + $0x58] sm:$0xff] 0.0
      %63 = vst [vmem:[#allocation2 + $0x60] sm:$0xff] 0.0
      %64 = vst [vmem:[#allocation2 + $0x68] sm:$0xff] 0.0
      %65 = vst [vmem:[#allocation2 + $0x70] sm:$0xff] 0.0
      %66 = vst [vmem:[#allocation2 + $0x78] sm:$0xff] 0.0
    $region21: #{tpu_custom_call.1} parent=1 // pred_fallthru
      _
    %v67 = vld [vmem:[#allocation2] sm:$0xff]
    %v68 = vld [vmem:[#allocation2 + $0x8] sm:$0xff]
    %v69 = vld [vmem:[#allocation2 + $0x10] sm:$0xff]
    %v70 = vld [vmem:[#allocation2 + $0x18] sm:$0xff]
    %v71 = vld [vmem:[#allocation2 + $0x20] sm:$0xff]
    %v72 = vld [vmem:[#allocation2 + $0x28] sm:$0xff]
    %v73 = vld [vmem:[#allocation2 + $0x30] sm:$0xff]
    %v74 = vld [vmem:[#allocation2 + $0x38] sm:$0xff]
    %v75 = vld [vmem:[#allocation2 + $0x40] sm:$0xff]
    %v76 = vld [vmem:[#allocation2 + $0x48] sm:$0xff]
    %v77 = vld [vmem:[#allocation2 + $0x50] sm:$0xff]
    %v78 = vld [vmem:[#allocation2 + $0x58] sm:$0xff]
    %v79 = vld [vmem:[#allocation2 + $0x60] sm:$0xff]
    %v80 = vld [vmem:[#allocation2 + $0x68] sm:$0xff]
    %v81 = vld [vmem:[#allocation2 + $0x70] sm:$0xff]
    %v82 = vld [vmem:[#allocation2 + $0x78] sm:$0xff]
    %v83 = vld [vmem:[#allocation3] sm:$0xf]
    %v84 = vld [vmem:[#allocation3 + $0x4] sm:$0xf]
    %v85 = vld [vmem:[#allocation3 + $0x8] sm:$0xf]
    %v86 = vld [vmem:[#allocation3 + $0xc] sm:$0xf]
    %v87 = vld [vmem:[#allocation3 + $0x10] sm:$0xf]
    %v88 = vld [vmem:[#allocation3 + $0x14] sm:$0xf]
    %v89 = vld [vmem:[#allocation3 + $0x18] sm:$0xf]
    %v90 = vld [vmem:[#allocation3 + $0x1c] sm:$0xf]
    %v91 = vld [vmem:[#allocation3 + $0x20] sm:$0xf]
    %v92 = vld [vmem:[#allocation3 + $0x24] sm:$0xf]
    %v93 = vld [vmem:[#allocation3 + $0x28] sm:$0xf]
    %v94 = vld [vmem:[#allocation3 + $0x2c] sm:$0xf]
    %v95 = vld [vmem:[#allocation3 + $0x30] sm:$0xf]
    %v96 = vld [vmem:[#allocation3 + $0x34] sm:$0xf]
    %v97 = vld [vmem:[#allocation3 + $0x38] sm:$0xf]
    %v98 = vld [vmem:[#allocation3 + $0x3c] sm:$0xf]
    %v99 = vld [vmem:[#allocation6] sm:$0xf]
    %v100 = vld [vmem:[#allocation6 + $0x4] sm:$0xf]
    %v101 = vld [vmem:[#allocation6 + $0x8] sm:$0xf]
    %v102 = vld [vmem:[#allocation6 + $0xc] sm:$0xf]
    %v103 = vld [vmem:[#allocation6 + $0x10] sm:$0xf]
    %v104 = vld [vmem:[#allocation6 + $0x14] sm:$0xf]
    %v105 = vld [vmem:[#allocation6 + $0x18] sm:$0xf]
    %v106 = vld [vmem:[#allocation6 + $0x1c] sm:$0xf]
    %v107 = vld [vmem:[#allocation6 + $0x20] sm:$0xf]
    %v108 = vld [vmem:[#allocation6 + $0x24] sm:$0xf]
    %v109 = vld [vmem:[#allocation6 + $0x28] sm:$0xf]
    %v110 = vld [vmem:[#allocation6 + $0x2c] sm:$0xf]
    %v111 = vld [vmem:[#allocation6 + $0x30] sm:$0xf]
    %v112 = vld [vmem:[#allocation6 + $0x34] sm:$0xf]
    %v113 = vld [vmem:[#allocation6 + $0x38] sm:$0xf]
    %v114 = vld [vmem:[#allocation6 + $0x3c] sm:$0xf]
    %v131 = vunpack.c.l.b16 %v83
    %v132 = vunpack.c.l.b16 %v84
    %v133 = vunpack.c.l.b16 %v85
    %v134 = vunpack.c.l.b16 %v86
    %v135 = vunpack.c.l.b16 %v87
    %v136 = vunpack.c.l.b16 %v88
    %v137 = vunpack.c.l.b16 %v89
    %v138 = vunpack.c.l.b16 %v90
    %v139 = vunpack.c.l.b16 %v91
    %v140 = vunpack.c.l.b16 %v92
    %v141 = vunpack.c.l.b16 %v93
    %v142 = vunpack.c.l.b16 %v94
    %v143 = vunpack.c.l.b16 %v95
    %v144 = vunpack.c.l.b16 %v96
    %v145 = vunpack.c.l.b16 %v97
    %v146 = vunpack.c.l.b16 %v98
    %v147 = vpack.c.b16 %v132, %v131
    %v148 = vpack.c.b16 %v134, %v133
    %v149 = vpack.c.b16 %v136, %v135
    %v150 = vpack.c.b16 %v138, %v137
    %v151 = vpack.c.b16 %v140, %v139
    %v152 = vpack.c.b16 %v142, %v141
    %v153 = vpack.c.b16 %v144, %v143
    %v154 = vpack.c.b16 %v146, %v145
    %v179 = vunpack.c.l.b16 %v99
    %v180 = vunpack.c.l.b16 %v100
    %v181 = vunpack.c.l.b16 %v101
    %v182 = vunpack.c.l.b16 %v102
    %v183 = vunpack.c.l.b16 %v103
    %v184 = vunpack.c.l.b16 %v104
    %v185 = vunpack.c.l.b16 %v105
    %v186 = vunpack.c.l.b16 %v106
    %v187 = vunpack.c.l.b16 %v107
    %v188 = vunpack.c.l.b16 %v108
    %v189 = vunpack.c.l.b16 %v109
    %v190 = vunpack.c.l.b16 %v110
    %v191 = vunpack.c.l.b16 %v111
    %v192 = vunpack.c.l.b16 %v112
    %v193 = vunpack.c.l.b16 %v113
    %v194 = vunpack.c.l.b16 %v114
    %v195 = vpack.c.b16 %v180, %v179
    %v196 = vpack.c.b16 %v182, %v181
    %v197 = vpack.c.b16 %v184, %v183
    %v198 = vpack.c.b16 %v186, %v185
    %v199 = vpack.c.b16 %v188, %v187
    %v200 = vpack.c.b16 %v190, %v189
    %v201 = vpack.c.b16 %v192, %v191
    %v202 = vpack.c.b16 %v194, %v193
    %211 = vmatpush.bf16.msra.mxu0 %v202
    %212 = vmatpush.bf16.msra.mxu0 %v201
    %213 = vmatpush.bf16.msra.mxu0 %v200
    %214 = vmatpush.bf16.msra.mxu0 %v199
    %215 = vmatpush.bf16.msra.mxu0 %v198
    %216 = vmatpush.bf16.msra.mxu0 %v197
    %217 = vmatpush.bf16.msra.mxu0 %v196
    %218 = vmatpush.bf16.msra.mxu0 %v195
    %219 = vmatmul.bf16.gmra.mxu0 %v147
    %v220 = vpop.f32.mrf.mxu0
    %v221 = vadd.f32 0.0, %v220
    %v222 = vpop.f32.mrf.mxu0
    %v223 = vadd.f32 0.0, %v222
    %224 = vmatmul.bf16.gmra.mxu0 %v148
    %v225 = vpop.f32.mrf.mxu0
    %v226 = vadd.f32 0.0, %v225
    %v227 = vpop.f32.mrf.mxu0
    %v228 = vadd.f32 0.0, %v227
    %229 = vmatmul.bf16.gmra.mxu0 %v149
    %v230 = vpop.f32.mrf.mxu0
    %v231 = vadd.f32 0.0, %v230
    %v232 = vpop.f32.mrf.mxu0
    %v233 = vadd.f32 0.0, %v232
    %234 = vmatmul.bf16.gmra.mxu0 %v150
    %v235 = vpop.f32.mrf.mxu0
    %v236 = vadd.f32 0.0, %v235
    %v237 = vpop.f32.mrf.mxu0
    %v238 = vadd.f32 0.0, %v237
    %239 = vmatmul.bf16.gmra.mxu0 %v151
    %v240 = vpop.f32.mrf.mxu0
    %v241 = vadd.f32 0.0, %v240
    %v242 = vpop.f32.mrf.mxu0
    %v243 = vadd.f32 0.0, %v242
    %244 = vmatmul.bf16.gmra.mxu0 %v152
    %v245 = vpop.f32.mrf.mxu0
    %v246 = vadd.f32 0.0, %v245
    %v247 = vpop.f32.mrf.mxu0
    %v248 = vadd.f32 0.0, %v247
    %249 = vmatmul.bf16.gmra.mxu0 %v153
    %v250 = vpop.f32.mrf.mxu0
    %v251 = vadd.f32 0.0, %v250
    %v252 = vpop.f32.mrf.mxu0
    %v253 = vadd.f32 0.0, %v252
    %254 = vmatmul.bf16.gmra.mxu0 %v154
    %v255 = vpop.f32.mrf.mxu0
    %v256 = vadd.f32 0.0, %v255
    %v257 = vpop.f32.mrf.mxu0
    %v258 = vadd.f32 0.0, %v257
    %259 = vdwg.mxu0
    %v260 = vadd.f32 %v67, %v221
    %v261 = vadd.f32 %v68, %v223
    %v262 = vadd.f32 %v69, %v226
    %v263 = vadd.f32 %v70, %v228
    %v264 = vadd.f32 %v71, %v231
    %v265 = vadd.f32 %v72, %v233
    %v266 = vadd.f32 %v73, %v236
    %v267 = vadd.f32 %v74, %v238
    %v268 = vadd.f32 %v75, %v241
    %v269 = vadd.f32 %v76, %v243
    %v270 = vadd.f32 %v77, %v246
    %v271 = vadd.f32 %v78, %v248
    %v272 = vadd.f32 %v79, %v251
    %v273 = vadd.f32 %v80, %v253
    %v274 = vadd.f32 %v81, %v256
    %v275 = vadd.f32 %v82, %v258
    %276 = vst [vmem:[#allocation2] sm:$0xff] %v260
    %277 = vst [vmem:[#allocation2 + $0x8] sm:$0xff] %v261
    %278 = vst [vmem:[#allocation2 + $0x10] sm:$0xff] %v262
    %279 = vst [vmem:[#allocation2 + $0x18] sm:$0xff] %v263
    %280 = vst [vmem:[#allocation2 + $0x20] sm:$0xff] %v264
    %281 = vst [vmem:[#allocation2 + $0x28] sm:$0xff] %v265
    %282 = vst [vmem:[#allocation2 + $0x30] sm:$0xff] %v266
    %283 = vst [vmem:[#allocation2 + $0x38] sm:$0xff] %v267
    %284 = vst [vmem:[#allocation2 + $0x40] sm:$0xff] %v268
    %285 = vst [vmem:[#allocation2 + $0x48] sm:$0xff] %v269
    %286 = vst [vmem:[#allocation2 + $0x50] sm:$0xff] %v270
    %287 = vst [vmem:[#allocation2 + $0x58] sm:$0xff] %v271
    %288 = vst [vmem:[#allocation2 + $0x60] sm:$0xff] %v272
    %289 = vst [vmem:[#allocation2 + $0x68] sm:$0xff] %v273
    %290 = vst [vmem:[#allocation2 + $0x70] sm:$0xff] %v274
    %291 = vst [vmem:[#allocation2 + $0x78] sm:$0xff] %v275
    // Predicated region
    $region22: #{tpu_custom_call.1} parent=1 // pred_check
      %p292 = pneg %p47
    $region23: #{tpu_custom_call.1} parent=1 // pred_check_branch
      %294 = sbr.rel (%p292) target = $region25
    $region24: #{tpu_custom_call.1} parent=1 // pred_region
      %v295 = vld [vmem:[#allocation2] sm:$0xff]
      %v296 = vld [vmem:[#allocation2 + $0x8] sm:$0xff]
      %v297 = vld [vmem:[#allocation2 + $0x10] sm:$0xff]
      %v298 = vld [vmem:[#allocation2 + $0x18] sm:$0xff]
      %v299 = vld [vmem:[#allocation2 + $0x20] sm:$0xff]
      %v300 = vld [vmem:[#allocation2 + $0x28] sm:$0xff]
      %v301 = vld [vmem:[#allocation2 + $0x30] sm:$0xff]
      %v302 = vld [vmem:[#allocation2 + $0x38] sm:$0xff]
      %v303 = vld [vmem:[#allocation2 + $0x40] sm:$0xff]
      %v304 = vld [vmem:[#allocation2 + $0x48] sm:$0xff]
      %v305 = vld [vmem:[#allocation2 + $0x50] sm:$0xff]
      %v306 = vld [vmem:[#allocation2 + $0x58] sm:$0xff]
      %v307 = vld [vmem:[#allocation2 + $0x60] sm:$0xff]
      %v308 = vld [vmem:[#allocation2 + $0x68] sm:$0xff]
      %v309 = vld [vmem:[#allocation2 + $0x70] sm:$0xff]
      %v310 = vld [vmem:[#allocation2 + $0x78] sm:$0xff]
      %v311 = vpack.c.bf16 %v295, %v295
      %v312 = vpack.c.bf16 %v296, %v296
      %v313 = vpack.c.bf16 %v297, %v297
      %v314 = vpack.c.bf16 %v298, %v298
      %v315 = vpack.c.bf16 %v299, %v299
      %v316 = vpack.c.bf16 %v300, %v300
      %v317 = vpack.c.bf16 %v301, %v301
      %v318 = vpack.c.bf16 %v302, %v302
      %v319 = vpack.c.bf16 %v303, %v303
      %v320 = vpack.c.bf16 %v304, %v304
      %v321 = vpack.c.bf16 %v305, %v305
      %v322 = vpack.c.bf16 %v306, %v306
      %v323 = vpack.c.bf16 %v307, %v307
      %v324 = vpack.c.bf16 %v308, %v308
      %v325 = vpack.c.bf16 %v309, %v309
      %v326 = vpack.c.bf16 %v310, %v310
      %327 = vst [vmem:[#allocation8] sm:$0xf] %v311
      %328 = vst [vmem:[#allocation8 + $0x4] sm:$0xf] %v312
      %329 = vst [vmem:[#allocation8 + $0x8] sm:$0xf] %v313
      %330 = vst [vmem:[#allocation8 + $0xc] sm:$0xf] %v314
      %331 = vst [vmem:[#allocation8 + $0x10] sm:$0xf] %v315
      %332 = vst [vmem:[#allocation8 + $0x14] sm:$0xf] %v316
      %333 = vst [vmem:[#allocation8 + $0x18] sm:$0xf] %v317
      %334 = vst [vmem:[#allocation8 + $0x1c] sm:$0xf] %v318
      %335 = vst [vmem:[#allocation8 + $0x20] sm:$0xf] %v319
      %336 = vst [vmem:[#allocation8 + $0x24] sm:$0xf] %v320
      %337 = vst [vmem:[#allocation8 + $0x28] sm:$0xf] %v321
      %338 = vst [vmem:[#allocation8 + $0x2c] sm:$0xf] %v322
      %339 = vst [vmem:[#allocation8 + $0x30] sm:$0xf] %v323
      %340 = vst [vmem:[#allocation8 + $0x34] sm:$0xf] %v324
      %341 = vst [vmem:[#allocation8 + $0x38] sm:$0xf] %v325
      %342 = vst [vmem:[#allocation8 + $0x3c] sm:$0xf] %v326
      %v343 = vadd.f32 %v295, %v296
      %v344 = vadd.f32 %v343, %v297
      %v345 = vadd.f32 %v344, %v298
      %v346 = vadd.f32 %v345, %v299
      %v347 = vadd.f32 %v346, %v300
      %v348 = vadd.f32 %v347, %v301
      %v349 = vadd.f32 %v348, %v302
      %v350 = vadd.f32 %v349, %v303
      %v351 = vadd.f32 %v350, %v304
      %v352 = vadd.f32 %v351, %v305
      %v353 = vadd.f32 %v352, %v306
      %v354 = vadd.f32 %v353, %v307
      %v355 = vadd.f32 %v354, %v308
      %v356 = vadd.f32 %v355, %v309
      %v357 = vadd.f32 %v356, %v310
      %v358 = vrot.slane %v357, 4
      %v359 = vadd.f32 %v357, %v358
      %v360 = vrot.slane %v359, 2
      %v361 = vadd.f32 %v359, %v360
      %v362 = vrot.slane %v361, 1
      %v363 = vadd.f32 %v361, %v362
      %v364 = vmul.f32 %v295, %v295
      %v365 = vmul.f32 %v296, %v296
      %v366 = vmul.f32 %v297, %v297
      %v367 = vmul.f32 %v298, %v298
      %v368 = vmul.f32 %v299, %v299
      %v369 = vmul.f32 %v300, %v300
      %v370 = vmul.f32 %v301, %v301
      %v371 = vmul.f32 %v302, %v302
      %v372 = vmul.f32 %v303, %v303
      %v373 = vmul.f32 %v304, %v304
      %v374 = vmul.f32 %v305, %v305
      %v375 = vmul.f32 %v306, %v306
      %v376 = vmul.f32 %v307, %v307
      %v377 = vmul.f32 %v308, %v308
      %v378 = vmul.f32 %v309, %v309
      %v379 = vmul.f32 %v310, %v310
      %v380 = vadd.f32 %v364, %v365
      %v381 = vadd.f32 %v380, %v366
      %v382 = vadd.f32 %v381, %v367
      %v383 = vadd.f32 %v382, %v368
      %v384 = vadd.f32 %v383, %v369
      %v385 = vadd.f32 %v384, %v370
      %v386 = vadd.f32 %v385, %v371
      %v387 = vadd.f32 %v386, %v372
      %v388 = vadd.f32 %v387, %v373
      %v389 = vadd.f32 %v388, %v374
      %v390 = vadd.f32 %v389, %v375
      %v391 = vadd.f32 %v390, %v376
      %v392 = vadd.f32 %v391, %v377
      %v393 = vadd.f32 %v392, %v378
      %v394 = vadd.f32 %v393, %v379
      %v395 = vrot.slane %v394, 4
      %v396 = vadd.f32 %v394, %v395
      %v397 = vrot.slane %v396, 2
      %v398 = vadd.f32 %v396, %v397
      %v399 = vrot.slane %v398, 1
      %v400 = vadd.f32 %v398, %v399
      %vm401 = vcmask 1040384
      %v402 = vsel %vm401, %v363, %v400
      %403 = vst [vmem:[#allocation9] sm:$0x3] %v402
    $region25: #{tpu_custom_call.1} parent=1 // pred_fallthru
      _
    // Predicated region
    $region26: #{tpu_custom_call.1} parent=1 // pred_check
      _
    $region27: #{tpu_custom_call.1} parent=1 // pred_check_branch
      %405 = sbr.rel (0) target = $region29
    $region28: #{tpu_custom_call.1} parent=1 // pred_region
      %407 = vsyncadd [#allocation5], 0
      %s408 = sshll.u32 [#allocation8], 4
      %s409 = int_to_ptr.vmem [resolvable:$true] %s408
      %s410 = sshll.u32 %s2, 4
      %s411 = int_to_ptr.hbm [resolvable:$true] %s410
      %416 = dma.vmem_to_hbm [thread:$0]  %s409, 1024, %s411, [#allocation5], 64, 64, 4
    $region29: #{tpu_custom_call.1} parent=1 // pred_fallthru
      _
    // Predicated region
    $region30: #{tpu_custom_call.1} parent=1 // pred_check
      _
    $region31: #{tpu_custom_call.1} parent=1 // pred_check_branch
      %418 = sbr.rel (0) target = $region33
    $region32: #{tpu_custom_call.1} parent=1 // pred_region
      %420 = vsyncadd [#allocation10], 0
      %s422 = sshll.u32 [#allocation9], 4
      %s423 = int_to_ptr.vmem [resolvable:$true] %s422
      %s424 = sshll.u32 %s3, 4
      %s425 = int_to_ptr.hbm [resolvable:$true] %s424
      %427 = dma.vmem_to_hbm [thread:$0]  %s423, 32, %s425, [#allocation10]
    $region33: #{tpu_custom_call.1} parent=1 // pred_fallthru
      _
    // Predicated region
    $region34: #{tpu_custom_call.1} parent=1 // pred_check
      _
    $region35: #{tpu_custom_call.1} parent=1 // pred_check_branch
      %429 = sbr.rel (0) target = $region37
    $region36: #{tpu_custom_call.1} parent=1 // pred_region
      %431 = dma.done [#allocation5], 1024
    $region37: #{tpu_custom_call.1} parent=1 // pred_fallthru
      _
    // Predicated region
    $region38: #{tpu_custom_call.1} parent=1 // pred_check
      _
    $region39: #{tpu_custom_call.1} parent=1 // pred_check_branch
      %433 = sbr.rel (0) target = $region41
    $region40: #{tpu_custom_call.1} parent=1 // pred_region
      %435 = dma.done [#allocation10], 32
    $region41: #{tpu_custom_call.1} parent=1 // pred_fallthru
      _
    %436 = vsyncpa [#allocation4], 1
    %437 = vsyncpa [#allocation7], 1
    %438 = vsyncpa [#allocation5], 1
    %439 = vsyncpa [#allocation10], 1

</llo_original>
